<compile_context>
chip_gen: v7x
topology: tpu7x:2x2x1
jax: 0.10.0
libtpu: 0.0.40
codegen_flags: <defaults>
</compile_context>

<pallas_src>
import jax
import jax.numpy as jnp
from jax.experimental import pallas as pl
from jax.experimental.pallas import tpu as pltpu


def gbdt_kernel(preds_ref, w_ref, p_ref, o_ref):
    """preds_ref: [n_est, tb], w_ref: [n_est, 1], p_ref: [1, tb], o_ref: [1, tb]."""
    # y_pred[b] = sum_e w[e] * preds[e, b]  -- VPU multiply + sublane reduce (no MXU)
    weighted = preds_ref[...] * w_ref[...]              # broadcast w over lanes
    y_pred = jnp.sum(weighted, axis=0, keepdims=True)   # [1, tb]
    p = p_ref[...]
    bias = jnp.log(p / (1.0 - p))                       # logit of init probabilities (EUP)
    o_ref[...] = jax.nn.sigmoid(y_pred + bias)          # lane-dense [1, tb] store


def simple_gbdt_forward(tree_preds, linear_w, init_proba, *, tb=None):
    """Fused SimpleGBDT head.

    tree_preds: [n_est, B]  stacked per-estimator predictions (estimator[0].predict(x))
    linear_w:   [n_est]     nn.Linear(n_est, 1, bias=False) weight
    init_proba: [B]         bias_predictor.predict_proba(x)[:, 1]
    returns:    [B]         sigmoid(tree_preds^T @ w + logit(init_proba))
    """
    n_est, B = tree_preds.shape
    if tb is None:
        tb = B  # single grid step: best on v5e/v6e (one TC); use B // 2 on v7x
    assert B % tb == 0, "batch must be divisible by the batch tile"
    assert tb == B or tb % 128 == 0, "sub-batch tiles must be lane-aligned (multiple of 128)"

    preds = tree_preds.astype(jnp.float32)
    w2 = linear_w.reshape(n_est, 1).astype(jnp.float32)
    p2 = init_proba.reshape(1, B).astype(jnp.float32)

    grid = (B // tb,)
    out = pl.pallas_call(
        gbdt_kernel,
        out_shape=jax.ShapeDtypeStruct((1, B), jnp.float32),
        grid_spec=pltpu.PrefetchScalarGridSpec(
            num_scalar_prefetch=0,
            grid=grid,
            in_specs=[
                pl.BlockSpec((n_est, tb), lambda i: (0, i)),  # tree predictions (batch on lanes)
                pl.BlockSpec((n_est, 1), lambda i: (0, 0)),   # linear weight
                pl.BlockSpec((1, tb), lambda i: (0, i)),      # init probabilities
            ],
            out_specs=pl.BlockSpec((1, tb), lambda i: (0, i)),  # lane-dense output
        ),
        compiler_params=pltpu.CompilerParams(
            dimension_semantics=("parallel",)  # shards across the 2 TCs on v7x
        ),
    )(preds, w2, p2)
    return out.reshape(B)  # matches torch .view(-1)


def reference_forward(tree_preds, linear_w, init_proba):
    y_pred = jnp.einsum("e,eb->b", linear_w, tree_preds)
    bias = jnp.log(init_proba / (1.0 - init_proba))
    return jax.nn.sigmoid(y_pred + bias)


if __name__ == "__main__":
    key = jax.random.PRNGKey(0)
    k_x, k_t, k_w, k_p = jax.random.split(key, 4)

    # Small shapes: batch=128 (one lane row), n_estimators=16, n_features=8.
    B, N_EST, F = 128, 16, 8

    # Raw features: only consumed by the sklearn estimators / init predictor,
    # which run outside the kernel (see header) -- kept here for shape context.
    x = jax.random.normal(k_x, (B, F), dtype=jnp.float32)

    # Deterministic stand-ins for the sklearn-side quantities the kernel consumes:
    tree_preds = jax.random.normal(k_t, (N_EST, B), dtype=jnp.float32)
    bound = 1.0 / jnp.sqrt(jnp.asarray(N_EST, jnp.float32))
    linear_w = jax.random.uniform(k_w, (N_EST,), jnp.float32, -bound, bound)
    init_proba = jax.nn.sigmoid(jax.random.normal(k_p, (B,), dtype=jnp.float32))

    out = simple_gbdt_forward(tree_preds, linear_w, init_proba)
    out = jax.block_until_ready(out)
    ref = reference_forward(tree_preds, linear_w, init_proba)
    assert out.shape == (B,)
    assert jnp.allclose(out, ref, atol=1e-5, rtol=1e-5), "mismatch vs reference"

    # Also exercise the tiled multi-step grid path (v7x usage: tb = B // 2
    # shards the "parallel" axis across the two TensorCores).
    B2 = 512
    k_t2, k_p2 = jax.random.split(jax.random.PRNGKey(1))
    tp2 = jax.random.normal(k_t2, (N_EST, B2), dtype=jnp.float32)
    p2 = jax.nn.sigmoid(jax.random.normal(k_p2, (B2,), dtype=jnp.float32))
    out2 = jax.block_until_ready(simple_gbdt_forward(tp2, linear_w, p2, tb=B2 // 2))
    ref2 = reference_forward(tp2, linear_w, p2)
    assert jnp.allclose(out2, ref2, atol=1e-5, rtol=1e-5), "mismatch vs reference (tiled)"

    print("KERNEL_OK")
</pallas_src>

<mosaic_0001>
module attributes {stable_mosaic.version = 11 : i64} {
  func.func @gbdt_kernel(%arg0: i32, %arg1: memref<16x128xf32, #tpu.memory_space<vmem>>, %arg2: memref<16x1xf32, #tpu.memory_space<vmem>>, %arg3: memref<1x128xf32, #tpu.memory_space<vmem>>, %arg4: memref<1x128xf32, #tpu.memory_space<vmem>>) attributes {dimension_semantics = [#tpu.dimension_semantics<parallel>], iteration_bounds = array<i64: 1>, scalar_prefetch = 0 : i64, scratch_operands = 0 : i64, tpu.core_type = #tpu.core_type<tc>, window_params = [{transform_indices = @transform_0, window_bounds = array<i64: 16, 128>}, {pipeline_mode = #tpu.pipeline_mode<synchronous>, transform_indices = @transform_1, window_bounds = array<i64: 16, 1>}, {transform_indices = @transform_2, window_bounds = array<i64: 1, 128>}, {transform_indices = @transform_3, window_bounds = array<i64: 1, 128>}]} {
    %c0 = arith.constant 0 : index
    %c0_0 = arith.constant 0 : index
    %0 = vector.load %arg1[%c0, %c0_0] : memref<16x128xf32, #tpu.memory_space<vmem>>, vector<16x128xf32>
    %c0_1 = arith.constant 0 : index
    %c0_2 = arith.constant 0 : index
    %1 = vector.load %arg2[%c0_1, %c0_2] : memref<16x1xf32, #tpu.memory_space<vmem>>, vector<16x1xf32>
    %2 = vector.broadcast %1 : vector<16x1xf32> to vector<16x128xf32>
    %3 = arith.mulf %0, %2 : vector<16x128xf32>
    %cst = arith.constant dense<0.000000e+00> : vector<128xf32>
    %4 = vector.multi_reduction <add>, %3, %cst [0] : vector<16x128xf32> to vector<128xf32>
    %5 = vector.shape_cast %4 : vector<128xf32> to vector<1x128xf32>
    %c0_3 = arith.constant 0 : index
    %c0_4 = arith.constant 0 : index
    %6 = vector.load %arg3[%c0_3, %c0_4] : memref<1x128xf32, #tpu.memory_space<vmem>>, vector<1x128xf32>
    %cst_5 = arith.constant 1.000000e+00 : f32
    %7 = vector.broadcast %cst_5 : f32 to vector<1x128xf32>
    %8 = arith.subf %7, %6 : vector<1x128xf32>
    %9 = arith.divf %6, %8 : vector<1x128xf32>
    %10 = math.log %9 : vector<1x128xf32>
    %11 = arith.addf %5, %10 : vector<1x128xf32>
    %12 = arith.negf %11 : vector<1x128xf32>
    %13 = math.exp %12 : vector<1x128xf32>
    %cst_6 = arith.constant 1.000000e+00 : f32
    %14 = vector.broadcast %cst_6 : f32 to vector<1x128xf32>
    %15 = arith.addf %14, %13 : vector<1x128xf32>
    %16 = arith.divf %14, %15 : vector<1x128xf32>
    %c0_7 = arith.constant 0 : index
    %c0_8 = arith.constant 0 : index
    %17 = vector.load %arg4[%c0_7, %c0_8] : memref<1x128xf32, #tpu.memory_space<vmem>>, vector<1x128xf32>
    tpu.vector_store %arg4[%c0_7, %c0_8], %16 {strides = array<i32>} : memref<1x128xf32, #tpu.memory_space<vmem>>, vector<1x128xf32>,
    return
  }
  func.func @transform_0(%arg0: i32) -> (i32, i32) {
    %c0_i32 = arith.constant 0 : i32
    %c0_i32_0 = arith.constant 0 : i32
    return %c0_i32, %arg0 : i32, i32
  }
  func.func @transform_1(%arg0: i32) -> (i32, i32) {
    %c0_i32 = arith.constant 0 : i32
    %c0_i32_0 = arith.constant 0 : i32
    %c0_i32_1 = arith.constant 0 : i32
    return %c0_i32, %c0_i32_0 : i32, i32
  }
  func.func @transform_2(%arg0: i32) -> (i32, i32) {
    %c0_i32 = arith.constant 0 : i32
    %c0_i32_0 = arith.constant 0 : i32
    return %c0_i32, %arg0 : i32, i32
  }
  func.func @transform_3(%arg0: i32) -> (i32, i32) {
    %c0_i32 = arith.constant 0 : i32
    %c0_i32_0 = arith.constant 0 : i32
    return %c0_i32, %arg0 : i32, i32
  }
}

</mosaic_0001>

<llo_original>
// kernel: tpu_custom_call.1
$region0: #{tpu_custom_call.1}
  #allocation0 [shape = 'u32[]', space=smem, size = 0x4, offset = 0x4, fixed_abs, tag = 'smem constant byte address 0x4 - core index']
  #allocation1 [shape = 'u32[144,128]{1,0:T(1,128)}', space=vmem, size = 0x12000, scoped, tag = 'internal scratch']
  %s0 = inlined_call_operand.vmem [shape: f32[16,128], index: 0, kind: input, shape index: {}]
  %s1 = inlined_call_operand.vmem [shape: f32[16,1], index: 1, kind: input, shape index: {}]
  %s2 = inlined_call_operand.vmem [shape: f32[1,128], index: 2, kind: input, shape index: {}]
  %s3 = inlined_call_operand.hbm [shape: f32[1,128], index: 3, kind: output, shape index: {}]
  %s4 = sld [smem:[#allocation0]]
  $region22: #{tpu_custom_call.1} parent=0
    _
  %s6 = ssub.s32 1, %s4
  %s7 = scalar_select 0, %s6, %s4
  $region1: #{tpu_custom_call.1} parent=0
    #allocation2 [shape = 'u8[512]{0}', space=vmem, size = 0x400, scoped, tag = 'output window, operand 0, single buffered']
    #allocation3 [shape = 's32[1]{0}', space=sflag, size = 0x4, scoped, tag = 'scoped memory for tpu_custom_call.1']
    %8 = vsyncpa [#allocation3], 0
    // Predicated region
    $region2: #{tpu_custom_call.1} parent=1 // pred_check
      _
    $region3: #{tpu_custom_call.1} parent=1 // pred_check_branch
      %10 = sbr.rel (0) target = $region5
    $region4: #{tpu_custom_call.1} parent=1 // pred_region
      _
    $region5: #{tpu_custom_call.1} parent=1 // pred_fallthru
      _
    // Predicated region
    $region6: #{tpu_custom_call.1} parent=1 // pred_check
      _
    $region7: #{tpu_custom_call.1} parent=1 // pred_check_branch
      %12 = sbr.rel (0) target = $region9
    $region8: #{tpu_custom_call.1} parent=1 // pred_region
      _
    $region9: #{tpu_custom_call.1} parent=1 // pred_fallthru
      _
    // Predicated region
    $region10: #{tpu_custom_call.1} parent=1 // pred_check
      _
    $region11: #{tpu_custom_call.1} parent=1 // pred_check_branch
      %14 = sbr.rel (0) target = $region13
    $region12: #{tpu_custom_call.1} parent=1 // pred_region
      _
    $region13: #{tpu_custom_call.1} parent=1 // pred_fallthru
      _
    %v15 = vld [vmem:[%s0] sm:$0xff]
    %v16 = vld [vmem:[%s0 + $0x8] sm:$0xff]
    %v17 = vld [vmem:[%s1] sm:$0xff]
    %v18 = vld [vmem:[%s1 + $0x8] sm:$0xff]
    %20 = vset.pattern.permute.xlu0 0
    %21 = vperm.xlu0 %20, %v17
    %v22 = vpop.permute.xlu0 %21
    %25 = vset.pattern.permute.xlu0 0
    %26 = vperm.xlu0 %25, %v18
    %v27 = vpop.permute.xlu0 %26
    %v29 = vmul.f32 %v15, %v22
    %v30 = vmul.f32 %v16, %v27
    %v31 = vadd.f32 %v29, %v30
    %v32 = vrot.slane %v31, 4
    %v33 = vadd.f32 %v31, %v32
    %v34 = vrot.slane %v33, 2
    %v35 = vadd.f32 %v33, %v34
    %v36 = vrot.slane %v35, 1
    %v37 = vadd.f32 %v35, %v36
    %v38 = vld [vmem:[%s2] sm:$0x1]
    %v39 = vsub.f32 1.0, %v38
    %v40 = vrcp.pop %v39
    %v41 = vmul.f32 %v38, %v40
    %v42 = vlog2.pop %v41
    %v43 = vmul.f32 %v42, 0.6931472
    %v44 = vadd.f32 %v37, %v43
    %v45 = vxor.u32 %v44, 2147483648
    %v46 = vmul.f32 %v45, 1.442695
    %v47 = vpow.pop %v46
    %v48 = vadd.f32 %v47, 1.0
    %v49 = vrcp.pop %v48
    %v50 = vmul.f32 1.0, %v49
    %51 = vst [vmem:[#allocation2] sm:$0x1] %v50
    // Predicated region
    $region14: #{tpu_custom_call.1} parent=1 // pred_check
      _
    $region15: #{tpu_custom_call.1} parent=1 // pred_check_branch
      %53 = sbr.rel (0) target = $region17
    $region16: #{tpu_custom_call.1} parent=1 // pred_region
      %s55 = ssub.s32 16, 16
      %56 = vsyncadd [#allocation3], %s55
      %s58 = sshll.u32 [#allocation2], 4
      %s59 = int_to_ptr.vmem [resolvable:$true] %s58
      %61 = dma.vmem_to_hbm [thread:$0]  %s59, 16, %s3, [#allocation3]
    $region17: #{tpu_custom_call.1} parent=1 // pred_fallthru
      _
    // Predicated region
    $region18: #{tpu_custom_call.1} parent=1 // pred_check
      _
    $region19: #{tpu_custom_call.1} parent=1 // pred_check_branch
      %63 = sbr.rel (0) target = $region21
    $region20: #{tpu_custom_call.1} parent=1 // pred_region
      %64 = dma.done [#allocation3], 16
    $region21: #{tpu_custom_call.1} parent=1 // pred_fallthru
      _
    %65 = vsyncpa [#allocation3], 1

</llo_original>
